<compile_context>
chip_gen: v5e
topology: v5e:2x2
jax: 0.10.0
libtpu: 0.0.40
codegen_flags: <defaults>
</compile_context>

<pallas_src>
import jax
import jax.numpy as jnp
from jax import lax
from jax.experimental import pallas as pl
from jax.experimental.pallas import tpu as pltpu

_EPS = 1e-5
_LANE = 128
_TM_TARGET = 1024
_TN_TARGET = 512
_TK_TARGET = 512
_VMEM_LIMIT = 48 * 1024 * 1024     # <= v7x 64 MiB/TC; plenty for this tile plan
_MXU_DTYPE = jnp.bfloat16          # MXU operand dtype; accumulation stays f32


def _round_up(x, m):
    return (x + m - 1) // m * m


def _pad2d(a, rows, cols):
    return jnp.pad(a, ((0, rows - a.shape[0]), (0, cols - a.shape[1])))


def _pad_vec(v, n):
    return jnp.pad(v, (0, n - v.shape[0]))


def _pick_tile(dim_pad, target):
    """Largest power-of-two multiple of 128 <= target that divides dim_pad."""
    t = target
    while t > _LANE and dim_pad % t != 0:
        t //= 2
    return t


# ----------------------------- Pallas kernels ------------------------------ #

def _matmul_stats_kernel(a_ref, w_ref, o_ref, sum_ref, ssq_ref, acc_ref):
    """Tiled matmul with K-accumulation; the epilogue writes the output tile and
    per-channel partial sum / sum-of-squares for the fused BatchNorm stats."""
    # program_id / num_programs only at kernel top level (NOT inside pl.when
    # bodies) -- required for the interpret lowering path.
    k = pl.program_id(2)
    k_last = pl.num_programs(2) - 1

    @pl.when(k == 0)
    def _init():
        acc_ref[...] = jnp.zeros_like(acc_ref)

    acc_ref[...] += jnp.dot(a_ref[...], w_ref[...],
                            preferred_element_type=jnp.float32)

    @pl.when(k == k_last)
    def _epilogue():
        y = acc_ref[...]
        o_ref[...] = y
        # Conv bias was dropped (cancels in training-mode BN) and padded M rows
        # of A are zero, so zero rows contribute nothing -> no row mask needed.
        # NOTE: 8 redundant stat sublanes per M tile; the wrapper reads row 0.
        sum_ref[...] = jnp.broadcast_to(
            jnp.sum(y, axis=0, keepdims=True), sum_ref.shape)
        ssq_ref[...] = jnp.broadcast_to(
            jnp.sum(y * y, axis=0, keepdims=True), ssq_ref.shape)


def _bn_skip_relu_kernel(y_ref, xs_ref, ws_ref, sc_ref, sh_ref, o_ref):
    # Fused tail: BN(y2) + (1x1-stride-2 skip conv, bskip folded in shift) + ReLU.
    skip = jnp.dot(xs_ref[...], ws_ref[...], preferred_element_type=jnp.float32)
    o_ref[...] = jnp.maximum(y_ref[...] * sc_ref[...] + sh_ref[...] + skip, 0.0)


# ----------------------------- pallas_call wrappers ------------------------ #

def _matmul_bn_stats(a, w, *, tm, tn, tk):
    m_pad, k_pad = a.shape
    np_ = w.shape[1]
    n_m, n_n, n_k = m_pad // tm, np_ // tn, k_pad // tk
    cost = pl.CostEstimate(
        flops=2 * m_pad * k_pad * np_,
        transcendentals=0,
        bytes_accessed=(a.size * a.dtype.itemsize + w.size * w.dtype.itemsize
                        + 4 * m_pad * np_))
    return pl.pallas_call(
        _matmul_stats_kernel,
        out_shape=(jax.ShapeDtypeStruct((m_pad, np_), jnp.float32),
                   jax.ShapeDtypeStruct((8 * n_m, np_), jnp.float32),
                   jax.ShapeDtypeStruct((8 * n_m, np_), jnp.float32)),
        grid_spec=pltpu.PrefetchScalarGridSpec(
            num_scalar_prefetch=0,
            grid=(n_m, n_n, n_k),
            in_specs=[pl.BlockSpec((tm, tk), lambda i, j, k: (i, k)),
                      pl.BlockSpec((tk, tn), lambda i, j, k: (k, j))],
            out_specs=[pl.BlockSpec((tm, tn), lambda i, j, k: (i, j)),
                       pl.BlockSpec((8, tn), lambda i, j, k: (i, j)),
                       pl.BlockSpec((8, tn), lambda i, j, k: (i, j))],
            scratch_shapes=[pltpu.VMEM((tm, tn), jnp.float32)]),
        compiler_params=pltpu.CompilerParams(
            dimension_semantics=("parallel", "parallel", "arbitrary"),
            vmem_limit_bytes=_VMEM_LIMIT),
        cost_estimate=cost,
    )(a, w)


def _bn_skip_add_relu(y, xs, ws, scale, shift, *, tm, tn):
    m_pad, np_ = y.shape
    cs = xs.shape[1]
    return pl.pallas_call(
        _bn_skip_relu_kernel,
        out_shape=jax.ShapeDtypeStruct((m_pad, np_), jnp.float32),
        grid_spec=pltpu.PrefetchScalarGridSpec(
            num_scalar_prefetch=0,
            grid=(m_pad // tm, np_ // tn),
            in_specs=[pl.BlockSpec((tm, tn), lambda i, j: (i, j)),
                      pl.BlockSpec((tm, cs), lambda i, j: (i, 0)),
                      pl.BlockSpec((cs, tn), lambda i, j: (0, j)),
                      pl.BlockSpec((1, tn), lambda i, j: (0, j)),
                      pl.BlockSpec((1, tn), lambda i, j: (0, j))],
            out_specs=pl.BlockSpec((tm, tn), lambda i, j: (i, j))),
        compiler_params=pltpu.CompilerParams(
            dimension_semantics=("parallel", "parallel"),
            vmem_limit_bytes=_VMEM_LIMIT),
    )(y, xs, ws, scale, shift)


# ------------------------------- JAX glue ---------------------------------- #

def _im2col_3x3(x_nhwc, stride, m_pad, k_pad, dtype):
    """3x3, pad=1 patch extraction -> [m_pad, k_pad] (zero padded), cast."""
    n, h, w, c = x_nhwc.shape
    ho = (h + 2 - 3) // stride + 1
    wo = (w + 2 - 3) // stride + 1
    xp = jnp.pad(x_nhwc, ((0, 0), (1, 1), (1, 1), (0, 0)))
    cols = []
    for di in range(3):
        for dj in range(3):
            cols.append(
                xp[:, di:di + stride * (ho - 1) + 1:stride,
                      dj:dj + stride * (wo - 1) + 1:stride, :])
    patches = jnp.concatenate(cols, axis=-1).reshape(n * ho * wo, 9 * c)
    return _pad2d(patches, m_pad, k_pad).astype(dtype)


def _w3x3_to_mat(w_oihw):
    # [O, I, 3, 3] -> [9*I, O], row order (kh, kw, cin) matching _im2col_3x3.
    o = w_oihw.shape[0]
    return jnp.transpose(w_oihw, (2, 3, 1, 0)).reshape(-1, o)


def _bn_scale_shift(psum, pssq, m_real, gamma, beta, extra_bias=None):
    """Combine per-M-tile partial sums into per-channel BN scale/shift."""
    np_ = psum.shape[-1]
    tot = jnp.sum(psum.reshape(-1, 8, np_)[:, 0, :], axis=0)
    totsq = jnp.sum(pssq.reshape(-1, 8, np_)[:, 0, :], axis=0)
    mean = tot / m_real
    # TODO(synk): E[x^2]-E[x]^2 can cancel for large activation means; switch to
    # a shifted / Welford-style accumulation if tolerances tighten.
    var = jnp.maximum(totsq / m_real - mean * mean, 0.0)   # biased batch var
    scale = _pad_vec(gamma, np_) * lax.rsqrt(var + _EPS)
    shift = _pad_vec(beta, np_) - mean * scale
    if extra_bias is not None:
        shift = shift + _pad_vec(extra_bias, np_)
    return scale.reshape(1, np_), shift.reshape(1, np_)


@jax.jit
def conv_block_forward(x_nchw, params):
    x = jnp.transpose(x_nchw, (0, 2, 3, 1)).astype(jnp.float32)   # NHWC
    n, h, w, cin = x.shape
    cout = params["w1"].shape[0]
    ho = (h + 2 - 3) // 2 + 1
    wo = (w + 2 - 3) // 2 + 1
    m = n * ho * wo

    np_ = _round_up(cout, _LANE)
    tn = _pick_tile(np_, _TN_TARGET)
    tm = min(_TM_TARGET, _round_up(m, 8))
    # Keep >= 2 M tiles when M is large so the "parallel" M axis can be split
    # across the two v7x TensorCores.
    if _round_up(m, tm) // tm < 2 and tm >= 512:
        tm = _round_up(tm // 2, 8)
    m_pad = _round_up(m, tm)

    # --- stage 1: conv3x3 stride-2 (bias b1 dropped: cancels in training BN) ---
    k1p = _round_up(9 * cin, _LANE)
    tk1 = _pick_tile(k1p, _TK_TARGET)
    a1 = _im2col_3x3(x, 2, m_pad, k1p, _MXU_DTYPE)
    w1 = _pad2d(_w3x3_to_mat(params["w1"]), k1p, np_).astype(_MXU_DTYPE)
    y1, s1, q1 = _matmul_bn_stats(a1, w1, tm=tm, tn=tn, tk=tk1)
    sc1, sh1 = _bn_scale_shift(s1, q1, m, params["gamma"], params["beta"])

    # BN+ReLU fused into the stage-2 im2col operand construction (no separate
    # streaming pass over y1); emit directly in bf16 to halve im2col HBM bytes.
    h1 = jnp.maximum(y1[:m, :cout] * sc1[:, :cout] + sh1[:, :cout], 0.0)
    h1 = h1.astype(_MXU_DTYPE).reshape(n, ho, wo, cout)

    # --- stage 2: conv3x3 stride-1 (bias b2 dropped, same cancellation) ---
    k2p = _round_up(9 * cout, _LANE)
    tk2 = _pick_tile(k2p, _TK_TARGET)
    a2 = _im2col_3x3(h1, 1, m_pad, k2p, _MXU_DTYPE)
    w2 = _pad2d(_w3x3_to_mat(params["w2"]), k2p, np_).astype(_MXU_DTYPE)
    y2, s2, q2 = _matmul_bn_stats(a2, w2, tm=tm, tn=tn, tk=tk2)
    # skip-conv bias folded into the BN shift of the fused tail kernel
    sc2, sh2 = _bn_scale_shift(s2, q2, m, params["gamma"], params["beta"],
                               extra_bias=params["bskip"])

    # --- skip path: center-tap columns of a1 are exactly x[:, ::2, ::2, :] ---
    cs = _round_up(cin, _LANE)
    xs = _pad2d(a1[:, 4 * cin:5 * cin], m_pad, cs)          # bf16, m_pad rows
    ws = _pad2d(params["wskip"][:, :, 0, 0].T, cs, np_).astype(_MXU_DTYPE)
    out = _bn_skip_add_relu(y2, xs, ws, sc2, sh2, tm=tm, tn=tn)

    out = out[:m, :cout].reshape(n, ho, wo, cout)
    return jnp.transpose(out, (0, 3, 1, 2))                 # back to NCHW


# ----------------------------- reference (JAX) ------------------------------ #

def _conv_ref(x, w, b, stride, pad):
    y = lax.conv_general_dilated(
        x, w, window_strides=(stride, stride),
        padding=[(pad, pad), (pad, pad)],
        dimension_numbers=("NCHW", "OIHW", "NCHW"))
    return y + b[None, :, None, None]


def _bn_ref(x, gamma, beta):
    mean = x.mean(axis=(0, 2, 3), keepdims=True)
    var = ((x - mean) ** 2).mean(axis=(0, 2, 3), keepdims=True)
    return (x - mean) / jnp.sqrt(var + _EPS) * gamma[None, :, None, None] \
        + beta[None, :, None, None]


def _ref_forward(x, p):
    y = _conv_ref(x, p["w1"], p["b1"], 2, 1)
    y = jnp.maximum(_bn_ref(y, p["gamma"], p["beta"]), 0.0)
    y = _conv_ref(y, p["w2"], p["b2"], 1, 1)
    y = _bn_ref(y, p["gamma"], p["beta"])
    s = _conv_ref(x, p["wskip"], p["bskip"], 2, 0)
    return jnp.maximum(y + s, 0.0)


# ---------------------------------- main ------------------------------------ #

if __name__ == "__main__":
    batch, in_filters, out_filters, spatial = 2, 4, 8, 16

    key = jax.random.PRNGKey(0)
    ks = jax.random.split(key, 9)
    params = {
        "w1": 0.1 * jax.random.normal(ks[0], (out_filters, in_filters, 3, 3), jnp.float32),
        "b1": 0.1 * jax.random.normal(ks[1], (out_filters,), jnp.float32),
        "w2": 0.1 * jax.random.normal(ks[2], (out_filters, out_filters, 3, 3), jnp.float32),
        "b2": 0.1 * jax.random.normal(ks[3], (out_filters,), jnp.float32),
        "wskip": 0.1 * jax.random.normal(ks[4], (out_filters, in_filters, 1, 1), jnp.float32),
        "bskip": 0.1 * jax.random.normal(ks[5], (out_filters,), jnp.float32),
        "gamma": 1.0 + 0.1 * jax.random.normal(ks[6], (out_filters,), jnp.float32),
        "beta": 0.1 * jax.random.normal(ks[7], (out_filters,), jnp.float32),
    }
    x = jax.random.normal(ks[8], (batch, in_filters, spatial, spatial), jnp.float32)

    out = jax.block_until_ready(conv_block_forward(x, params))
    assert out.shape == (batch, out_filters, spatial // 2, spatial // 2), out.shape

    ref = jax.block_until_ready(_ref_forward(x, params))
    # bf16 MXU operands (f32 accumulation) vs. an all-f32 XLA reference.
    assert jnp.allclose(out, ref, atol=1e-1, rtol=1e-1), float(jnp.abs(out - ref).max())

    print("KERNEL_OK")
</pallas_src>

<mosaic_0001>
module attributes {stable_mosaic.version = 11 : i64} {
  func.func @_matmul_stats_kernel(%arg0: i32, %arg1: i32, %arg2: i32, %arg3: memref<128x128xbf16, #tpu.memory_space<vmem>>, %arg4: memref<128x128xbf16, #tpu.memory_space<vmem>>, %arg5: memref<128x128xf32, #tpu.memory_space<vmem>>, %arg6: memref<8x128xf32, #tpu.memory_space<vmem>>, %arg7: memref<8x128xf32, #tpu.memory_space<vmem>>, %arg8: memref<128x128xf32, #tpu.memory_space<vmem>>) attributes {dimension_semantics = [#tpu.dimension_semantics<parallel>, #tpu.dimension_semantics<parallel>, #tpu.dimension_semantics<arbitrary>], iteration_bounds = array<i64: 1, 1, 1>, scalar_prefetch = 0 : i64, scratch_operands = 1 : i64, tpu.core_type = #tpu.core_type<tc>, window_params = [{transform_indices = @transform_0, window_bounds = array<i64: 128, 128>}, {transform_indices = @transform_1, window_bounds = array<i64: 128, 128>}, {transform_indices = @transform_2, window_bounds = array<i64: 128, 128>}, {transform_indices = @transform_3, window_bounds = array<i64: 8, 128>}, {transform_indices = @transform_4, window_bounds = array<i64: 8, 128>}]} {
    %c0_i32 = arith.constant 0 : i32
    %0 = arith.cmpi eq, %arg2, %c0_i32 : i32
    %1 = arith.extui %0 : i1 to i32
    %c0_i32_0 = arith.constant 0 : i32
    %2 = arith.cmpi ne, %1, %c0_i32_0 : i32
    scf.if %2 {
      %cst_10 = arith.constant 0.000000e+00 : f32
      %12 = vector.broadcast %cst_10 : f32 to vector<128x128xf32>
      %c0_11 = arith.constant 0 : index
      %c0_12 = arith.constant 0 : index
      %13 = vector.load %arg8[%c0_11, %c0_12] : memref<128x128xf32, #tpu.memory_space<vmem>>, vector<128x128xf32>
      tpu.vector_store %arg8[%c0_11, %c0_12], %12 {strides = array<i32>} : memref<128x128xf32, #tpu.memory_space<vmem>>, vector<128x128xf32>,
    } else {
    }
    %c0 = arith.constant 0 : index
    %c0_1 = arith.constant 0 : index
    %3 = vector.load %arg8[%c0, %c0_1] : memref<128x128xf32, #tpu.memory_space<vmem>>, vector<128x128xf32>
    %c0_2 = arith.constant 0 : index
    %c0_3 = arith.constant 0 : index
    %4 = vector.load %arg3[%c0_2, %c0_3] : memref<128x128xbf16, #tpu.memory_space<vmem>>, vector<128x128xbf16>
    %c0_4 = arith.constant 0 : index
    %c0_5 = arith.constant 0 : index
    %5 = vector.load %arg4[%c0_4, %c0_5] : memref<128x128xbf16, #tpu.memory_space<vmem>>, vector<128x128xbf16>
    %cst = arith.constant dense<0.000000e+00> : vector<128x128xf32>
    %6 = tpu.matmul %4, %5, %cst {dimension_numbers = #tpu.dot_dimension_numbers<[1], [0], [0], [1], [0, 0, 1, 1], [], []>} : vector<128x128xbf16>, vector<128x128xbf16>, vector<128x128xf32> -> vector<128x128xf32>
    %7 = arith.addf %3, %6 : vector<128x128xf32>
    %c0_6 = arith.constant 0 : index
    %c0_7 = arith.constant 0 : index
    %8 = vector.load %arg8[%c0_6, %c0_7] : memref<128x128xf32, #tpu.memory_space<vmem>>, vector<128x128xf32>
    tpu.vector_store %arg8[%c0_6, %c0_7], %7 {strides = array<i32>} : memref<128x128xf32, #tpu.memory_space<vmem>>, vector<128x128xf32>,
    %c0_i32_8 = arith.constant 0 : i32
    %9 = arith.cmpi eq, %arg2, %c0_i32_8 : i32
    %10 = arith.extui %9 : i1 to i32
    %c0_i32_9 = arith.constant 0 : i32
    %11 = arith.cmpi ne, %10, %c0_i32_9 : i32
    scf.if %11 {
      %c0_10 = arith.constant 0 : index
      %c0_11 = arith.constant 0 : index
      %12 = vector.load %arg8[%c0_10, %c0_11] : memref<128x128xf32, #tpu.memory_space<vmem>>, vector<128x128xf32>
      %c0_12 = arith.constant 0 : index
      %c0_13 = arith.constant 0 : index
      %13 = vector.load %arg5[%c0_12, %c0_13] : memref<128x128xf32, #tpu.memory_space<vmem>>, vector<128x128xf32>
      tpu.vector_store %arg5[%c0_12, %c0_13], %12 {strides = array<i32>} : memref<128x128xf32, #tpu.memory_space<vmem>>, vector<128x128xf32>,
      %cst_14 = arith.constant dense<0.000000e+00> : vector<128xf32>
      %14 = vector.multi_reduction <add>, %12, %cst_14 [0] : vector<128x128xf32> to vector<128xf32>
      %15 = vector.shape_cast %14 : vector<128xf32> to vector<1x128xf32>
      %16 = vector.shape_cast %15 : vector<1x128xf32> to vector<1x128xf32>
      %17 = vector.broadcast %16 : vector<1x128xf32> to vector<8x128xf32>
      %c0_15 = arith.constant 0 : index
      %c0_16 = arith.constant 0 : index
      %18 = vector.load %arg6[%c0_15, %c0_16] : memref<8x128xf32, #tpu.memory_space<vmem>>, vector<8x128xf32>
      tpu.vector_store %arg6[%c0_15, %c0_16], %17 {strides = array<i32>} : memref<8x128xf32, #tpu.memory_space<vmem>>, vector<8x128xf32>,
      %19 = arith.mulf %12, %12 : vector<128x128xf32>
      %cst_17 = arith.constant dense<0.000000e+00> : vector<128xf32>
      %20 = vector.multi_reduction <add>, %19, %cst_17 [0] : vector<128x128xf32> to vector<128xf32>
      %21 = vector.shape_cast %20 : vector<128xf32> to vector<1x128xf32>
      %22 = vector.shape_cast %21 : vector<1x128xf32> to vector<1x128xf32>
      %23 = vector.broadcast %22 : vector<1x128xf32> to vector<8x128xf32>
      %c0_18 = arith.constant 0 : index
      %c0_19 = arith.constant 0 : index
      %24 = vector.load %arg7[%c0_18, %c0_19] : memref<8x128xf32, #tpu.memory_space<vmem>>, vector<8x128xf32>
      tpu.vector_store %arg7[%c0_18, %c0_19], %23 {strides = array<i32>} : memref<8x128xf32, #tpu.memory_space<vmem>>, vector<8x128xf32>,
    } else {
    }
    return
  }
  func.func @transform_0(%arg0: i32, %arg1: i32, %arg2: i32) -> (i32, i32) {
    %c0_i32 = arith.constant 0 : i32
    return %arg0, %arg2 : i32, i32
  }
  func.func @transform_1(%arg0: i32, %arg1: i32, %arg2: i32) -> (i32, i32) {
    %c0_i32 = arith.constant 0 : i32
    return %arg2, %arg1 : i32, i32
  }
  func.func @transform_2(%arg0: i32, %arg1: i32, %arg2: i32) -> (i32, i32) {
    %c0_i32 = arith.constant 0 : i32
    return %arg0, %arg1 : i32, i32
  }
  func.func @transform_3(%arg0: i32, %arg1: i32, %arg2: i32) -> (i32, i32) {
    %c0_i32 = arith.constant 0 : i32
    return %arg0, %arg1 : i32, i32
  }
  func.func @transform_4(%arg0: i32, %arg1: i32, %arg2: i32) -> (i32, i32) {
    %c0_i32 = arith.constant 0 : i32
    return %arg0, %arg1 : i32, i32
  }
}

module attributes {stable_mosaic.version = 11 : i64} {
  func.func @_bn_skip_relu_kernel(%arg0: i32, %arg1: i32, %arg2: memref<128x128xf32, #tpu.memory_space<vmem>>, %arg3: memref<128x128xbf16, #tpu.memory_space<vmem>>, %arg4: memref<128x128xbf16, #tpu.memory_space<vmem>>, %arg5: memref<1x128xf32, #tpu.memory_space<vmem>>, %arg6: memref<1x128xf32, #tpu.memory_space<vmem>>, %arg7: memref<128x128xf32, #tpu.memory_space<vmem>>) attributes {dimension_semantics = [#tpu.dimension_semantics<parallel>, #tpu.dimension_semantics<parallel>], iteration_bounds = array<i64: 1, 1>, scalar_prefetch = 0 : i64, scratch_operands = 0 : i64, tpu.core_type = #tpu.core_type<tc>, window_params = [{transform_indices = @transform_0, window_bounds = array<i64: 128, 128>}, {transform_indices = @transform_1, window_bounds = array<i64: 128, 128>}, {transform_indices = @transform_2, window_bounds = array<i64: 128, 128>}, {transform_indices = @transform_3, window_bounds = array<i64: 1, 128>}, {transform_indices = @transform_4, window_bounds = array<i64: 1, 128>}, {transform_indices = @transform_5, window_bounds = array<i64: 128, 128>}]} {
    %c0 = arith.constant 0 : index
    %c0_0 = arith.constant 0 : index
    %0 = vector.load %arg3[%c0, %c0_0] : memref<128x128xbf16, #tpu.memory_space<vmem>>, vector<128x128xbf16>
    %c0_1 = arith.constant 0 : index
    %c0_2 = arith.constant 0 : index
    %1 = vector.load %arg4[%c0_1, %c0_2] : memref<128x128xbf16, #tpu.memory_space<vmem>>, vector<128x128xbf16>
    %cst = arith.constant dense<0.000000e+00> : vector<128x128xf32>
    %2 = tpu.matmul %0, %1, %cst {dimension_numbers = #tpu.dot_dimension_numbers<[1], [0], [0], [1], [0, 0, 1, 1], [], []>} : vector<128x128xbf16>, vector<128x128xbf16>, vector<128x128xf32> -> vector<128x128xf32>
    %c0_3 = arith.constant 0 : index
    %c0_4 = arith.constant 0 : index
    %3 = vector.load %arg2[%c0_3, %c0_4] : memref<128x128xf32, #tpu.memory_space<vmem>>, vector<128x128xf32>
    %c0_5 = arith.constant 0 : index
    %c0_6 = arith.constant 0 : index
    %4 = vector.load %arg5[%c0_5, %c0_6] : memref<1x128xf32, #tpu.memory_space<vmem>>, vector<1x128xf32>
    %5 = vector.broadcast %4 : vector<1x128xf32> to vector<128x128xf32>
    %6 = arith.mulf %3, %5 : vector<128x128xf32>
    %c0_7 = arith.constant 0 : index
    %c0_8 = arith.constant 0 : index
    %7 = vector.load %arg6[%c0_7, %c0_8] : memref<1x128xf32, #tpu.memory_space<vmem>>, vector<1x128xf32>
    %8 = vector.broadcast %7 : vector<1x128xf32> to vector<128x128xf32>
    %9 = arith.addf %6, %8 : vector<128x128xf32>
    %10 = arith.addf %9, %2 : vector<128x128xf32>
    %cst_9 = arith.constant 0.000000e+00 : f32
    %11 = vector.broadcast %cst_9 : f32 to vector<128x128xf32>
    %12 = arith.maximumf %10, %11 : vector<128x128xf32>
    %c0_10 = arith.constant 0 : index
    %c0_11 = arith.constant 0 : index
    %13 = vector.load %arg7[%c0_10, %c0_11] : memref<128x128xf32, #tpu.memory_space<vmem>>, vector<128x128xf32>
    tpu.vector_store %arg7[%c0_10, %c0_11], %12 {strides = array<i32>} : memref<128x128xf32, #tpu.memory_space<vmem>>, vector<128x128xf32>,
    return
  }
  func.func @transform_0(%arg0: i32, %arg1: i32) -> (i32, i32) {
    %c0_i32 = arith.constant 0 : i32
    return %arg0, %arg1 : i32, i32
  }
  func.func @transform_1(%arg0: i32, %arg1: i32) -> (i32, i32) {
    %c0_i32 = arith.constant 0 : i32
    %c0_i32_0 = arith.constant 0 : i32
    return %arg0, %c0_i32 : i32, i32
  }
  func.func @transform_2(%arg0: i32, %arg1: i32) -> (i32, i32) {
    %c0_i32 = arith.constant 0 : i32
    %c0_i32_0 = arith.constant 0 : i32
    return %c0_i32, %arg1 : i32, i32
  }
  func.func @transform_3(%arg0: i32, %arg1: i32) -> (i32, i32) {
    %c0_i32 = arith.constant 0 : i32
    %c0_i32_0 = arith.constant 0 : i32
    return %c0_i32, %arg1 : i32, i32
  }
  func.func @transform_4(%arg0: i32, %arg1: i32) -> (i32, i32) {
    %c0_i32 = arith.constant 0 : i32
    %c0_i32_0 = arith.constant 0 : i32
    return %c0_i32, %arg1 : i32, i32
  }
  func.func @transform_5(%arg0: i32, %arg1: i32) -> (i32, i32) {
    %c0_i32 = arith.constant 0 : i32
    return %arg0, %arg1 : i32, i32
  }
}

</mosaic_0001>

<llo_original>
// kernel: conv_block_forward.3
$region0: #{conv_block_forward.3}
  #allocation0 [shape = 'u32[]', space=smem, size = 0x4, offset = 0x4, fixed_abs, tag = 'smem constant byte address 0x4 - core index']
  #allocation1 [shape = 'u32[72,128]{1,0:T(1,128)}', space=vmem, size = 0x9000, scoped, tag = 'internal scratch']
  #allocation2 [shape = 'f32[128,128]{1,0:T(8,128)}', space=vmem, size = 0x10000, scoped, tag = 'scratch operand']
  %s0 = inlined_call_operand.vmem [shape: bf16[128,128], index: 0, kind: input, shape index: {}]
  %s1 = inlined_call_operand.vmem [shape: bf16[128,128], index: 1, kind: input, shape index: {}]
  %s2 = inlined_call_operand.vmem [shape: f32[128,128], index: 2, kind: output, shape index: {0}]
  %s3 = inlined_call_operand.vmem [shape: f32[8,128], index: 3, kind: output, shape index: {1}]
  %s4 = inlined_call_operand.vmem [shape: f32[8,128], index: 4, kind: output, shape index: {2}]
  %5 = xla_tuple %s2, %s3, %s4
  %s6 = sld [smem:[#allocation0]]
  $region42: #{conv_block_forward.3} parent=0
    _
  %s8 = ssub.s32 1, %s6
  %s9 = scalar_select 0, %s8, %s6
  // Predicated region
  $region2: #{conv_block_forward.3} parent=0 // pred_check
    _
  $region3: #{conv_block_forward.3} parent=0 // pred_check_branch
    %11 = sbr.rel (0) target = $region5
  $region4: #{conv_block_forward.3} parent=0 // pred_region
    _
  $region5: #{conv_block_forward.3} parent=0 // pred_fallthru
    _
  // Predicated region
  $region6: #{conv_block_forward.3} parent=0 // pred_check
    _
  $region7: #{conv_block_forward.3} parent=0 // pred_check_branch
    %13 = sbr.rel (0) target = $region9
  $region8: #{conv_block_forward.3} parent=0 // pred_region
    _
  $region9: #{conv_block_forward.3} parent=0 // pred_fallthru
    _
  %p14 = scmp.eq.s32.totalorder 0, 0
  // Predicated region
  $region10: #{conv_block_forward.3} parent=0 // pred_check
    %p15 = pneg %p14
  $region11: #{conv_block_forward.3} parent=0 // pred_check_branch
    %17 = sbr.rel (%p15) target = $region13
  $region12: #{conv_block_forward.3} parent=0 // pred_region
    %18 = vst [vmem:[#allocation2] sm:$0xff] 0.0
    %19 = vst [vmem:[#allocation2 + $0x8] sm:$0xff] 0.0
    %20 = vst [vmem:[#allocation2 + $0x10] sm:$0xff] 0.0
    %21 = vst [vmem:[#allocation2 + $0x18] sm:$0xff] 0.0
    %22 = vst [vmem:[#allocation2 + $0x20] sm:$0xff] 0.0
    %23 = vst [vmem:[#allocation2 + $0x28] sm:$0xff] 0.0
    %24 = vst [vmem:[#allocation2 + $0x30] sm:$0xff] 0.0
    %25 = vst [vmem:[#allocation2 + $0x38] sm:$0xff] 0.0
    %26 = vst [vmem:[#allocation2 + $0x40] sm:$0xff] 0.0
    %27 = vst [vmem:[#allocation2 + $0x48] sm:$0xff] 0.0
    %28 = vst [vmem:[#allocation2 + $0x50] sm:$0xff] 0.0
    %29 = vst [vmem:[#allocation2 + $0x58] sm:$0xff] 0.0
    %30 = vst [vmem:[#allocation2 + $0x60] sm:$0xff] 0.0
    %31 = vst [vmem:[#allocation2 + $0x68] sm:$0xff] 0.0
    %32 = vst [vmem:[#allocation2 + $0x70] sm:$0xff] 0.0
    %33 = vst [vmem:[#allocation2 + $0x78] sm:$0xff] 0.0
  $region13: #{conv_block_forward.3} parent=0 // pred_fallthru
    _
  %v34 = vld [vmem:[#allocation2] sm:$0xff]
  %v35 = vld [vmem:[#allocation2 + $0x8] sm:$0xff]
  %v36 = vld [vmem:[#allocation2 + $0x10] sm:$0xff]
  %v37 = vld [vmem:[#allocation2 + $0x18] sm:$0xff]
  %v38 = vld [vmem:[#allocation2 + $0x20] sm:$0xff]
  %v39 = vld [vmem:[#allocation2 + $0x28] sm:$0xff]
  %v40 = vld [vmem:[#allocation2 + $0x30] sm:$0xff]
  %v41 = vld [vmem:[#allocation2 + $0x38] sm:$0xff]
  %v42 = vld [vmem:[#allocation2 + $0x40] sm:$0xff]
  %v43 = vld [vmem:[#allocation2 + $0x48] sm:$0xff]
  %v44 = vld [vmem:[#allocation2 + $0x50] sm:$0xff]
  %v45 = vld [vmem:[#allocation2 + $0x58] sm:$0xff]
  %v46 = vld [vmem:[#allocation2 + $0x60] sm:$0xff]
  %v47 = vld [vmem:[#allocation2 + $0x68] sm:$0xff]
  %v48 = vld [vmem:[#allocation2 + $0x70] sm:$0xff]
  %v49 = vld [vmem:[#allocation2 + $0x78] sm:$0xff]
  %v50 = vld [vmem:[%s0] sm:$0xf]
  %v51 = vld [vmem:[%s0 + $0x4] sm:$0xf]
  %v52 = vld [vmem:[%s0 + $0x8] sm:$0xf]
  %v53 = vld [vmem:[%s0 + $0xc] sm:$0xf]
  %v54 = vld [vmem:[%s0 + $0x10] sm:$0xf]
  %v55 = vld [vmem:[%s0 + $0x14] sm:$0xf]
  %v56 = vld [vmem:[%s0 + $0x18] sm:$0xf]
  %v57 = vld [vmem:[%s0 + $0x1c] sm:$0xf]
  %v58 = vld [vmem:[%s0 + $0x20] sm:$0xf]
  %v59 = vld [vmem:[%s0 + $0x24] sm:$0xf]
  %v60 = vld [vmem:[%s0 + $0x28] sm:$0xf]
  %v61 = vld [vmem:[%s0 + $0x2c] sm:$0xf]
  %v62 = vld [vmem:[%s0 + $0x30] sm:$0xf]
  %v63 = vld [vmem:[%s0 + $0x34] sm:$0xf]
  %v64 = vld [vmem:[%s0 + $0x38] sm:$0xf]
  %v65 = vld [vmem:[%s0 + $0x3c] sm:$0xf]
  %v66 = vld [vmem:[%s1] sm:$0xf]
  %v67 = vld [vmem:[%s1 + $0x4] sm:$0xf]
  %v68 = vld [vmem:[%s1 + $0x8] sm:$0xf]
  %v69 = vld [vmem:[%s1 + $0xc] sm:$0xf]
  %v70 = vld [vmem:[%s1 + $0x10] sm:$0xf]
  %v71 = vld [vmem:[%s1 + $0x14] sm:$0xf]
  %v72 = vld [vmem:[%s1 + $0x18] sm:$0xf]
  %v73 = vld [vmem:[%s1 + $0x1c] sm:$0xf]
  %v74 = vld [vmem:[%s1 + $0x20] sm:$0xf]
  %v75 = vld [vmem:[%s1 + $0x24] sm:$0xf]
  %v76 = vld [vmem:[%s1 + $0x28] sm:$0xf]
  %v77 = vld [vmem:[%s1 + $0x2c] sm:$0xf]
  %v78 = vld [vmem:[%s1 + $0x30] sm:$0xf]
  %v79 = vld [vmem:[%s1 + $0x34] sm:$0xf]
  %v80 = vld [vmem:[%s1 + $0x38] sm:$0xf]
  %v81 = vld [vmem:[%s1 + $0x3c] sm:$0xf]
  %v98 = vunpack.c.l.b16 %v50
  %v99 = vunpack.c.l.b16 %v51
  %v100 = vunpack.c.l.b16 %v52
  %v101 = vunpack.c.l.b16 %v53
  %v102 = vunpack.c.l.b16 %v54
  %v103 = vunpack.c.l.b16 %v55
  %v104 = vunpack.c.l.b16 %v56
  %v105 = vunpack.c.l.b16 %v57
  %v106 = vunpack.c.l.b16 %v58
  %v107 = vunpack.c.l.b16 %v59
  %v108 = vunpack.c.l.b16 %v60
  %v109 = vunpack.c.l.b16 %v61
  %v110 = vunpack.c.l.b16 %v62
  %v111 = vunpack.c.l.b16 %v63
  %v112 = vunpack.c.l.b16 %v64
  %v113 = vunpack.c.l.b16 %v65
  %v114 = vpack.c.b16 %v99, %v98
  %v115 = vpack.c.b16 %v101, %v100
  %v116 = vpack.c.b16 %v103, %v102
  %v117 = vpack.c.b16 %v105, %v104
  %v118 = vpack.c.b16 %v107, %v106
  %v119 = vpack.c.b16 %v109, %v108
  %v120 = vpack.c.b16 %v111, %v110
  %v121 = vpack.c.b16 %v113, %v112
  %v146 = vunpack.c.l.b16 %v66
  %v147 = vunpack.c.l.b16 %v67
  %v148 = vunpack.c.l.b16 %v68
  %v149 = vunpack.c.l.b16 %v69
  %v150 = vunpack.c.l.b16 %v70
  %v151 = vunpack.c.l.b16 %v71
  %v152 = vunpack.c.l.b16 %v72
  %v153 = vunpack.c.l.b16 %v73
  %v154 = vunpack.c.l.b16 %v74
  %v155 = vunpack.c.l.b16 %v75
  %v156 = vunpack.c.l.b16 %v76
  %v157 = vunpack.c.l.b16 %v77
  %v158 = vunpack.c.l.b16 %v78
  %v159 = vunpack.c.l.b16 %v79
  %v160 = vunpack.c.l.b16 %v80
  %v161 = vunpack.c.l.b16 %v81
  %v162 = vpack.c.b16 %v147, %v146
  %v163 = vpack.c.b16 %v149, %v148
  %v164 = vpack.c.b16 %v151, %v150
  %v165 = vpack.c.b16 %v153, %v152
  %v166 = vpack.c.b16 %v155, %v154
  %v167 = vpack.c.b16 %v157, %v156
  %v168 = vpack.c.b16 %v159, %v158
  %v169 = vpack.c.b16 %v161, %v160
  %178 = vmatpush.bf16.msra.mxu0 %v169
  %179 = vmatpush.bf16.msra.mxu0 %v168
  %180 = vmatpush.bf16.msra.mxu0 %v167
  %181 = vmatpush.bf16.msra.mxu0 %v166
  %182 = vmatpush.bf16.msra.mxu0 %v165
  %183 = vmatpush.bf16.msra.mxu0 %v164
  %184 = vmatpush.bf16.msra.mxu0 %v163
  %185 = vmatpush.bf16.msra.mxu0 %v162
  %186 = vmatmul.bf16.gmra.mxu0 %v114
  %v187 = vpop.f32.mrf.mxu0
  %v188 = vadd.f32 0.0, %v187
  %v189 = vpop.f32.mrf.mxu0
  %v190 = vadd.f32 0.0, %v189
  %191 = vmatmul.bf16.gmra.mxu0 %v115
  %v192 = vpop.f32.mrf.mxu0
  %v193 = vadd.f32 0.0, %v192
  %v194 = vpop.f32.mrf.mxu0
  %v195 = vadd.f32 0.0, %v194
  %196 = vmatmul.bf16.gmra.mxu0 %v116
  %v197 = vpop.f32.mrf.mxu0
  %v198 = vadd.f32 0.0, %v197
  %v199 = vpop.f32.mrf.mxu0
  %v200 = vadd.f32 0.0, %v199
  %201 = vmatmul.bf16.gmra.mxu0 %v117
  %v202 = vpop.f32.mrf.mxu0
  %v203 = vadd.f32 0.0, %v202
  %v204 = vpop.f32.mrf.mxu0
  %v205 = vadd.f32 0.0, %v204
  %206 = vmatmul.bf16.gmra.mxu0 %v118
  %v207 = vpop.f32.mrf.mxu0
  %v208 = vadd.f32 0.0, %v207
  %v209 = vpop.f32.mrf.mxu0
  %v210 = vadd.f32 0.0, %v209
  %211 = vmatmul.bf16.gmra.mxu0 %v119
  %v212 = vpop.f32.mrf.mxu0
  %v213 = vadd.f32 0.0, %v212
  %v214 = vpop.f32.mrf.mxu0
  %v215 = vadd.f32 0.0, %v214
  %216 = vmatmul.bf16.gmra.mxu0 %v120
  %v217 = vpop.f32.mrf.mxu0
  %v218 = vadd.f32 0.0, %v217
  %v219 = vpop.f32.mrf.mxu0
  %v220 = vadd.f32 0.0, %v219
  %221 = vmatmul.bf16.gmra.mxu0 %v121
  %v222 = vpop.f32.mrf.mxu0
  %v223 = vadd.f32 0.0, %v222
  %v224 = vpop.f32.mrf.mxu0
  %v225 = vadd.f32 0.0, %v224
  %226 = vdwg.mxu0
  %v227 = vadd.f32 %v34, %v188
  %v228 = vadd.f32 %v35, %v190
  %v229 = vadd.f32 %v36, %v193
  %v230 = vadd.f32 %v37, %v195
  %v231 = vadd.f32 %v38, %v198
  %v232 = vadd.f32 %v39, %v200
  %v233 = vadd.f32 %v40, %v203
  %v234 = vadd.f32 %v41, %v205
  %v235 = vadd.f32 %v42, %v208
  %v236 = vadd.f32 %v43, %v210
  %v237 = vadd.f32 %v44, %v213
  %v238 = vadd.f32 %v45, %v215
  %v239 = vadd.f32 %v46, %v218
  %v240 = vadd.f32 %v47, %v220
  %v241 = vadd.f32 %v48, %v223
  %v242 = vadd.f32 %v49, %v225
  %243 = vst [vmem:[#allocation2] sm:$0xff] %v227
  %244 = vst [vmem:[#allocation2 + $0x8] sm:$0xff] %v228
  %245 = vst [vmem:[#allocation2 + $0x10] sm:$0xff] %v229
  %246 = vst [vmem:[#allocation2 + $0x18] sm:$0xff] %v230
  %247 = vst [vmem:[#allocation2 + $0x20] sm:$0xff] %v231
  %248 = vst [vmem:[#allocation2 + $0x28] sm:$0xff] %v232
  %249 = vst [vmem:[#allocation2 + $0x30] sm:$0xff] %v233
  %250 = vst [vmem:[#allocation2 + $0x38] sm:$0xff] %v234
  %251 = vst [vmem:[#allocation2 + $0x40] sm:$0xff] %v235
  %252 = vst [vmem:[#allocation2 + $0x48] sm:$0xff] %v236
  %253 = vst [vmem:[#allocation2 + $0x50] sm:$0xff] %v237
  %254 = vst [vmem:[#allocation2 + $0x58] sm:$0xff] %v238
  %255 = vst [vmem:[#allocation2 + $0x60] sm:$0xff] %v239
  %256 = vst [vmem:[#allocation2 + $0x68] sm:$0xff] %v240
  %257 = vst [vmem:[#allocation2 + $0x70] sm:$0xff] %v241
  %258 = vst [vmem:[#allocation2 + $0x78] sm:$0xff] %v242
  // Predicated region
  $region14: #{conv_block_forward.3} parent=0 // pred_check
    %p259 = pneg %p14
  $region15: #{conv_block_forward.3} parent=0 // pred_check_branch
    %261 = sbr.rel (%p259) target = $region17
  $region16: #{conv_block_forward.3} parent=0 // pred_region
    %v262 = vld [vmem:[#allocation2] sm:$0xff]
    %v263 = vld [vmem:[#allocation2 + $0x8] sm:$0xff]
    %v264 = vld [vmem:[#allocation2 + $0x10] sm:$0xff]
    %v265 = vld [vmem:[#allocation2 + $0x18] sm:$0xff]
    %v266 = vld [vmem:[#allocation2 + $0x20] sm:$0xff]
    %v267 = vld [vmem:[#allocation2 + $0x28] sm:$0xff]
    %v268 = vld [vmem:[#allocation2 + $0x30] sm:$0xff]
    %v269 = vld [vmem:[#allocation2 + $0x38] sm:$0xff]
    %v270 = vld [vmem:[#allocation2 + $0x40] sm:$0xff]
    %v271 = vld [vmem:[#allocation2 + $0x48] sm:$0xff]
    %v272 = vld [vmem:[#allocation2 + $0x50] sm:$0xff]
    %v273 = vld [vmem:[#allocation2 + $0x58] sm:$0xff]
    %v274 = vld [vmem:[#allocation2 + $0x60] sm:$0xff]
    %v275 = vld [vmem:[#allocation2 + $0x68] sm:$0xff]
    %v276 = vld [vmem:[#allocation2 + $0x70] sm:$0xff]
    %v277 = vld [vmem:[#allocation2 + $0x78] sm:$0xff]
    %278 = vst [vmem:[%s2] sm:$0xff] %v262
    %279 = vst [vmem:[%s2 + $0x8] sm:$0xff] %v263
    %280 = vst [vmem:[%s2 + $0x10] sm:$0xff] %v264
    %281 = vst [vmem:[%s2 + $0x18] sm:$0xff] %v265
    %282 = vst [vmem:[%s2 + $0x20] sm:$0xff] %v266
    %283 = vst [vmem:[%s2 + $0x28] sm:$0xff] %v267
    %284 = vst [vmem:[%s2 + $0x30] sm:$0xff] %v268
    %285 = vst [vmem:[%s2 + $0x38] sm:$0xff] %v269
    %286 = vst [vmem:[%s2 + $0x40] sm:$0xff] %v270
    %287 = vst [vmem:[%s2 + $0x48] sm:$0xff] %v271
    %288 = vst [vmem:[%s2 + $0x50] sm:$0xff] %v272
    %289 = vst [vmem:[%s2 + $0x58] sm:$0xff] %v273
    %290 = vst [vmem:[%s2 + $0x60] sm:$0xff] %v274
    %291 = vst [vmem:[%s2 + $0x68] sm:$0xff] %v275
    %292 = vst [vmem:[%s2 + $0x70] sm:$0xff] %v276
    %293 = vst [vmem:[%s2 + $0x78] sm:$0xff] %v277
    %v294 = vadd.f32 %v262, %v263
    %v295 = vadd.f32 %v294, %v264
    %v296 = vadd.f32 %v295, %v265
    %v297 = vadd.f32 %v296, %v266
    %v298 = vadd.f32 %v297, %v267
    %v299 = vadd.f32 %v298, %v268
    %v300 = vadd.f32 %v299, %v269
    %v301 = vadd.f32 %v300, %v270
    %v302 = vadd.f32 %v301, %v271
    %v303 = vadd.f32 %v302, %v272
    %v304 = vadd.f32 %v303, %v273
    %v305 = vadd.f32 %v304, %v274
    %v306 = vadd.f32 %v305, %v275
    %v307 = vadd.f32 %v306, %v276
    %v308 = vadd.f32 %v307, %v277
    %v309 = vrot.slane %v308, 4
    %v310 = vadd.f32 %v308, %v309
    %v311 = vrot.slane %v310, 2
    %v312 = vadd.f32 %v310, %v311
    %v313 = vrot.slane %v312, 1
    %v314 = vadd.f32 %v312, %v313
    %315 = vst [vmem:[%s3] sm:$0xff] %v314
    %v316 = vmul.f32 %v262, %v262
    %v317 = vmul.f32 %v263, %v263
    %v318 = vmul.f32 %v264, %v264
    %v319 = vmul.f32 %v265, %v265
    %v320 = vmul.f32 %v266, %v266
    %v321 = vmul.f32 %v267, %v267
    %v322 = vmul.f32 %v268, %v268
    %v323 = vmul.f32 %v269, %v269
    %v324 = vmul.f32 %v270, %v270
    %v325 = vmul.f32 %v271, %v271
    %v326 = vmul.f32 %v272, %v272
    %v327 = vmul.f32 %v273, %v273
    %v328 = vmul.f32 %v274, %v274
    %v329 = vmul.f32 %v275, %v275
    %v330 = vmul.f32 %v276, %v276
    %v331 = vmul.f32 %v277, %v277
    %v332 = vadd.f32 %v316, %v317
    %v333 = vadd.f32 %v332, %v318
    %v334 = vadd.f32 %v333, %v319
    %v335 = vadd.f32 %v334, %v320
    %v336 = vadd.f32 %v335, %v321
    %v337 = vadd.f32 %v336, %v322
    %v338 = vadd.f32 %v337, %v323
    %v339 = vadd.f32 %v338, %v324
    %v340 = vadd.f32 %v339, %v325
    %v341 = vadd.f32 %v340, %v326
    %v342 = vadd.f32 %v341, %v327
    %v343 = vadd.f32 %v342, %v328
    %v344 = vadd.f32 %v343, %v329
    %v345 = vadd.f32 %v344, %v330
    %v346 = vadd.f32 %v345, %v331
    %v347 = vrot.slane %v346, 4
    %v348 = vadd.f32 %v346, %v347
    %v349 = vrot.slane %v348, 2
    %v350 = vadd.f32 %v348, %v349
    %v351 = vrot.slane %v350, 1
    %v352 = vadd.f32 %v350, %v351
    %353 = vst [vmem:[%s4] sm:$0xff] %v352
  $region17: #{conv_block_forward.3} parent=0 // pred_fallthru
    _
  // Predicated region
  $region18: #{conv_block_forward.3} parent=0 // pred_check
    _
  $region19: #{conv_block_forward.3} parent=0 // pred_check_branch
    %355 = sbr.rel (0) target = $region21
  $region20: #{conv_block_forward.3} parent=0 // pred_region
    _
  $region21: #{conv_block_forward.3} parent=0 // pred_fallthru
    _
  // Predicated region
  $region22: #{conv_block_forward.3} parent=0 // pred_check
    _
  $region23: #{conv_block_forward.3} parent=0 // pred_check_branch
    %357 = sbr.rel (0) target = $region25
  $region24: #{conv_block_forward.3} parent=0 // pred_region
    _
  $region25: #{conv_block_forward.3} parent=0 // pred_fallthru
    _
  // Predicated region
  $region26: #{conv_block_forward.3} parent=0 // pred_check
    _
  $region27: #{conv_block_forward.3} parent=0 // pred_check_branch
    %359 = sbr.rel (0) target = $region29
  $region28: #{conv_block_forward.3} parent=0 // pred_region
    _
  $region29: #{conv_block_forward.3} parent=0 // pred_fallthru
    _
  // Predicated region
  $region30: #{conv_block_forward.3} parent=0 // pred_check
    _
  $region31: #{conv_block_forward.3} parent=0 // pred_check_branch
    %361 = sbr.rel (0) target = $region33
  $region32: #{conv_block_forward.3} parent=0 // pred_region
    _
  $region33: #{conv_block_forward.3} parent=0 // pred_fallthru
    _
  // Predicated region
  $region34: #{conv_block_forward.3} parent=0 // pred_check
    _
  $region35: #{conv_block_forward.3} parent=0 // pred_check_branch
    %363 = sbr.rel (0) target = $region37
  $region36: #{conv_block_forward.3} parent=0 // pred_region
    _
  $region37: #{conv_block_forward.3} parent=0 // pred_fallthru
    _
  // Predicated region
  $region38: #{conv_block_forward.3} parent=0 // pred_check
    _
  $region39: #{conv_block_forward.3} parent=0 // pred_check_branch
    %365 = sbr.rel (0) target = $region41
  $region40: #{conv_block_forward.3} parent=0 // pred_region
    _
  $region41: #{conv_block_forward.3} parent=0 // pred_fallthru
    _

// kernel: conv_block_forward.5
$region0: #{conv_block_forward.5}
  #allocation0 [shape = 'u32[]', space=smem, size = 0x4, offset = 0x4, fixed_abs, tag = 'smem constant byte address 0x4 - core index']
  #allocation1 [shape = 'u32[72,128]{1,0:T(1,128)}', space=vmem, size = 0x9000, scoped, tag = 'internal scratch']
  %s0 = inlined_call_operand.vmem [shape: f32[128,128], index: 0, kind: input, shape index: {}]
  %s1 = inlined_call_operand.vmem [shape: bf16[128,128], index: 1, kind: input, shape index: {}]
  %s2 = inlined_call_operand.vmem [shape: bf16[128,128], index: 2, kind: input, shape index: {}]
  %s3 = inlined_call_operand.vmem [shape: f32[1,128], index: 3, kind: input, shape index: {}]
  %s4 = inlined_call_operand.vmem [shape: f32[1,128], index: 4, kind: input, shape index: {}]
  %s5 = inlined_call_operand.vmem [shape: f32[128,128], index: 5, kind: output, shape index: {}]
  %s6 = sld [smem:[#allocation0]]
  $region30: #{conv_block_forward.5} parent=0
    _
  %s8 = ssub.s32 1, %s6
  %s9 = scalar_select 0, %s8, %s6
  // Predicated region
  $region2: #{conv_block_forward.5} parent=0 // pred_check
    _
  $region3: #{conv_block_forward.5} parent=0 // pred_check_branch
    %11 = sbr.rel (0) target = $region5
  $region4: #{conv_block_forward.5} parent=0 // pred_region
    _
  $region5: #{conv_block_forward.5} parent=0 // pred_fallthru
    _
  // Predicated region
  $region6: #{conv_block_forward.5} parent=0 // pred_check
    _
  $region7: #{conv_block_forward.5} parent=0 // pred_check_branch
    %13 = sbr.rel (0) target = $region9
  $region8: #{conv_block_forward.5} parent=0 // pred_region
    _
  $region9: #{conv_block_forward.5} parent=0 // pred_fallthru
    _
  // Predicated region
  $region10: #{conv_block_forward.5} parent=0 // pred_check
    _
  $region11: #{conv_block_forward.5} parent=0 // pred_check_branch
    %15 = sbr.rel (0) target = $region13
  $region12: #{conv_block_forward.5} parent=0 // pred_region
    _
  $region13: #{conv_block_forward.5} parent=0 // pred_fallthru
    _
  // Predicated region
  $region14: #{conv_block_forward.5} parent=0 // pred_check
    _
  $region15: #{conv_block_forward.5} parent=0 // pred_check_branch
    %17 = sbr.rel (0) target = $region17
  $region16: #{conv_block_forward.5} parent=0 // pred_region
    _
  $region17: #{conv_block_forward.5} parent=0 // pred_fallthru
    _
  // Predicated region
  $region18: #{conv_block_forward.5} parent=0 // pred_check
    _
  $region19: #{conv_block_forward.5} parent=0 // pred_check_branch
    %19 = sbr.rel (0) target = $region21
  $region20: #{conv_block_forward.5} parent=0 // pred_region
    _
  $region21: #{conv_block_forward.5} parent=0 // pred_fallthru
    _
  %v20 = vld [vmem:[%s1] sm:$0xf]
  %v21 = vld [vmem:[%s1 + $0x4] sm:$0xf]
  %v22 = vld [vmem:[%s1 + $0x8] sm:$0xf]
  %v23 = vld [vmem:[%s1 + $0xc] sm:$0xf]
  %v24 = vld [vmem:[%s1 + $0x10] sm:$0xf]
  %v25 = vld [vmem:[%s1 + $0x14] sm:$0xf]
  %v26 = vld [vmem:[%s1 + $0x18] sm:$0xf]
  %v27 = vld [vmem:[%s1 + $0x1c] sm:$0xf]
  %v28 = vld [vmem:[%s1 + $0x20] sm:$0xf]
  %v29 = vld [vmem:[%s1 + $0x24] sm:$0xf]
  %v30 = vld [vmem:[%s1 + $0x28] sm:$0xf]
  %v31 = vld [vmem:[%s1 + $0x2c] sm:$0xf]
  %v32 = vld [vmem:[%s1 + $0x30] sm:$0xf]
  %v33 = vld [vmem:[%s1 + $0x34] sm:$0xf]
  %v34 = vld [vmem:[%s1 + $0x38] sm:$0xf]
  %v35 = vld [vmem:[%s1 + $0x3c] sm:$0xf]
  %v36 = vld [vmem:[%s2] sm:$0xf]
  %v37 = vld [vmem:[%s2 + $0x4] sm:$0xf]
  %v38 = vld [vmem:[%s2 + $0x8] sm:$0xf]
  %v39 = vld [vmem:[%s2 + $0xc] sm:$0xf]
  %v40 = vld [vmem:[%s2 + $0x10] sm:$0xf]
  %v41 = vld [vmem:[%s2 + $0x14] sm:$0xf]
  %v42 = vld [vmem:[%s2 + $0x18] sm:$0xf]
  %v43 = vld [vmem:[%s2 + $0x1c] sm:$0xf]
  %v44 = vld [vmem:[%s2 + $0x20] sm:$0xf]
  %v45 = vld [vmem:[%s2 + $0x24] sm:$0xf]
  %v46 = vld [vmem:[%s2 + $0x28] sm:$0xf]
  %v47 = vld [vmem:[%s2 + $0x2c] sm:$0xf]
  %v48 = vld [vmem:[%s2 + $0x30] sm:$0xf]
  %v49 = vld [vmem:[%s2 + $0x34] sm:$0xf]
  %v50 = vld [vmem:[%s2 + $0x38] sm:$0xf]
  %v51 = vld [vmem:[%s2 + $0x3c] sm:$0xf]
  %v68 = vunpack.c.l.b16 %v20
  %v69 = vunpack.c.l.b16 %v21
  %v70 = vunpack.c.l.b16 %v22
  %v71 = vunpack.c.l.b16 %v23
  %v72 = vunpack.c.l.b16 %v24
  %v73 = vunpack.c.l.b16 %v25
  %v74 = vunpack.c.l.b16 %v26
  %v75 = vunpack.c.l.b16 %v27
  %v76 = vunpack.c.l.b16 %v28
  %v77 = vunpack.c.l.b16 %v29
  %v78 = vunpack.c.l.b16 %v30
  %v79 = vunpack.c.l.b16 %v31
  %v80 = vunpack.c.l.b16 %v32
  %v81 = vunpack.c.l.b16 %v33
  %v82 = vunpack.c.l.b16 %v34
  %v83 = vunpack.c.l.b16 %v35
  %v84 = vpack.c.b16 %v69, %v68
  %v85 = vpack.c.b16 %v71, %v70
  %v86 = vpack.c.b16 %v73, %v72
  %v87 = vpack.c.b16 %v75, %v74
  %v88 = vpack.c.b16 %v77, %v76
  %v89 = vpack.c.b16 %v79, %v78
  %v90 = vpack.c.b16 %v81, %v80
  %v91 = vpack.c.b16 %v83, %v82
  %v116 = vunpack.c.l.b16 %v36
  %v117 = vunpack.c.l.b16 %v37
  %v118 = vunpack.c.l.b16 %v38
  %v119 = vunpack.c.l.b16 %v39
  %v120 = vunpack.c.l.b16 %v40
  %v121 = vunpack.c.l.b16 %v41
  %v122 = vunpack.c.l.b16 %v42
  %v123 = vunpack.c.l.b16 %v43
  %v124 = vunpack.c.l.b16 %v44
  %v125 = vunpack.c.l.b16 %v45
  %v126 = vunpack.c.l.b16 %v46
  %v127 = vunpack.c.l.b16 %v47
  %v128 = vunpack.c.l.b16 %v48
  %v129 = vunpack.c.l.b16 %v49
  %v130 = vunpack.c.l.b16 %v50
  %v131 = vunpack.c.l.b16 %v51
  %v132 = vpack.c.b16 %v117, %v116
  %v133 = vpack.c.b16 %v119, %v118
  %v134 = vpack.c.b16 %v121, %v120
  %v135 = vpack.c.b16 %v123, %v122
  %v136 = vpack.c.b16 %v125, %v124
  %v137 = vpack.c.b16 %v127, %v126
  %v138 = vpack.c.b16 %v129, %v128
  %v139 = vpack.c.b16 %v131, %v130
  %148 = vmatpush.bf16.msra.mxu0 %v139
  %149 = vmatpush.bf16.msra.mxu0 %v138
  %150 = vmatpush.bf16.msra.mxu0 %v137
  %151 = vmatpush.bf16.msra.mxu0 %v136
  %152 = vmatpush.bf16.msra.mxu0 %v135
  %153 = vmatpush.bf16.msra.mxu0 %v134
  %154 = vmatpush.bf16.msra.mxu0 %v133
  %155 = vmatpush.bf16.msra.mxu0 %v132
  %156 = vmatmul.bf16.gmra.mxu0 %v84
  %v157 = vpop.f32.mrf.mxu0
  %v158 = vadd.f32 0.0, %v157
  %v159 = vpop.f32.mrf.mxu0
  %v160 = vadd.f32 0.0, %v159
  %161 = vmatmul.bf16.gmra.mxu0 %v85
  %v162 = vpop.f32.mrf.mxu0
  %v163 = vadd.f32 0.0, %v162
  %v164 = vpop.f32.mrf.mxu0
  %v165 = vadd.f32 0.0, %v164
  %166 = vmatmul.bf16.gmra.mxu0 %v86
  %v167 = vpop.f32.mrf.mxu0
  %v168 = vadd.f32 0.0, %v167
  %v169 = vpop.f32.mrf.mxu0
  %v170 = vadd.f32 0.0, %v169
  %171 = vmatmul.bf16.gmra.mxu0 %v87
  %v172 = vpop.f32.mrf.mxu0
  %v173 = vadd.f32 0.0, %v172
  %v174 = vpop.f32.mrf.mxu0
  %v175 = vadd.f32 0.0, %v174
  %176 = vmatmul.bf16.gmra.mxu0 %v88
  %v177 = vpop.f32.mrf.mxu0
  %v178 = vadd.f32 0.0, %v177
  %v179 = vpop.f32.mrf.mxu0
  %v180 = vadd.f32 0.0, %v179
  %181 = vmatmul.bf16.gmra.mxu0 %v89
  %v182 = vpop.f32.mrf.mxu0
  %v183 = vadd.f32 0.0, %v182
  %v184 = vpop.f32.mrf.mxu0
  %v185 = vadd.f32 0.0, %v184
  %186 = vmatmul.bf16.gmra.mxu0 %v90
  %v187 = vpop.f32.mrf.mxu0
  %v188 = vadd.f32 0.0, %v187
  %v189 = vpop.f32.mrf.mxu0
  %v190 = vadd.f32 0.0, %v189
  %191 = vmatmul.bf16.gmra.mxu0 %v91
  %v192 = vpop.f32.mrf.mxu0
  %v193 = vadd.f32 0.0, %v192
  %v194 = vpop.f32.mrf.mxu0
  %v195 = vadd.f32 0.0, %v194
  %196 = vdwg.mxu0
  %v197 = vld [vmem:[%s0] sm:$0xff]
  %v198 = vld [vmem:[%s0 + $0x8] sm:$0xff]
  %v199 = vld [vmem:[%s0 + $0x10] sm:$0xff]
  %v200 = vld [vmem:[%s0 + $0x18] sm:$0xff]
  %v201 = vld [vmem:[%s0 + $0x20] sm:$0xff]
  %v202 = vld [vmem:[%s0 + $0x28] sm:$0xff]
  %v203 = vld [vmem:[%s0 + $0x30] sm:$0xff]
  %v204 = vld [vmem:[%s0 + $0x38] sm:$0xff]
  %v205 = vld [vmem:[%s0 + $0x40] sm:$0xff]
  %v206 = vld [vmem:[%s0 + $0x48] sm:$0xff]
  %v207 = vld [vmem:[%s0 + $0x50] sm:$0xff]
  %v208 = vld [vmem:[%s0 + $0x58] sm:$0xff]
  %v209 = vld [vmem:[%s0 + $0x60] sm:$0xff]
  %v210 = vld [vmem:[%s0 + $0x68] sm:$0xff]
  %v211 = vld [vmem:[%s0 + $0x70] sm:$0xff]
  %v212 = vld [vmem:[%s0 + $0x78] sm:$0xff]
  %v213 = vld [vmem:[%s3] sm:$0x1]
  %v215 = vperm.slane %v213, 0
  %v217 = vmul.f32 %v197, %v215
  %v218 = vmul.f32 %v198, %v215
  %v219 = vmul.f32 %v199, %v215
  %v220 = vmul.f32 %v200, %v215
  %v221 = vmul.f32 %v201, %v215
  %v222 = vmul.f32 %v202, %v215
  %v223 = vmul.f32 %v203, %v215
  %v224 = vmul.f32 %v204, %v215
  %v225 = vmul.f32 %v205, %v215
  %v226 = vmul.f32 %v206, %v215
  %v227 = vmul.f32 %v207, %v215
  %v228 = vmul.f32 %v208, %v215
  %v229 = vmul.f32 %v209, %v215
  %v230 = vmul.f32 %v210, %v215
  %v231 = vmul.f32 %v211, %v215
  %v232 = vmul.f32 %v212, %v215
  %v233 = vld [vmem:[%s4] sm:$0x1]
  %v235 = vperm.slane %v233, 0
  %v237 = vadd.f32 %v217, %v235
  %v238 = vadd.f32 %v218, %v235
  %v239 = vadd.f32 %v219, %v235
  %v240 = vadd.f32 %v220, %v235
  %v241 = vadd.f32 %v221, %v235
  %v242 = vadd.f32 %v222, %v235
  %v243 = vadd.f32 %v223, %v235
  %v244 = vadd.f32 %v224, %v235
  %v245 = vadd.f32 %v225, %v235
  %v246 = vadd.f32 %v226, %v235
  %v247 = vadd.f32 %v227, %v235
  %v248 = vadd.f32 %v228, %v235
  %v249 = vadd.f32 %v229, %v235
  %v250 = vadd.f32 %v230, %v235
  %v251 = vadd.f32 %v231, %v235
  %v252 = vadd.f32 %v232, %v235
  %v253 = vadd.f32 %v237, %v158
  %v254 = vadd.f32 %v238, %v160
  %v255 = vadd.f32 %v239, %v163
  %v256 = vadd.f32 %v240, %v165
  %v257 = vadd.f32 %v241, %v168
  %v258 = vadd.f32 %v242, %v170
  %v259 = vadd.f32 %v243, %v173
  %v260 = vadd.f32 %v244, %v175
  %v261 = vadd.f32 %v245, %v178
  %v262 = vadd.f32 %v246, %v180
  %v263 = vadd.f32 %v247, %v183
  %v264 = vadd.f32 %v248, %v185
  %v265 = vadd.f32 %v249, %v188
  %v266 = vadd.f32 %v250, %v190
  %v267 = vadd.f32 %v251, %v193
  %v268 = vadd.f32 %v252, %v195
  %v269 = vmax.f32 %v253, 0.0
  %v270 = vmax.f32 %v254, 0.0
  %v271 = vmax.f32 %v255, 0.0
  %v272 = vmax.f32 %v256, 0.0
  %v273 = vmax.f32 %v257, 0.0
  %v274 = vmax.f32 %v258, 0.0
  %v275 = vmax.f32 %v259, 0.0
  %v276 = vmax.f32 %v260, 0.0
  %v277 = vmax.f32 %v261, 0.0
  %v278 = vmax.f32 %v262, 0.0
  %v279 = vmax.f32 %v263, 0.0
  %v280 = vmax.f32 %v264, 0.0
  %v281 = vmax.f32 %v265, 0.0
  %v282 = vmax.f32 %v266, 0.0
  %v283 = vmax.f32 %v267, 0.0
  %v284 = vmax.f32 %v268, 0.0
  %285 = vst [vmem:[%s5] sm:$0xff] %v269
  %286 = vst [vmem:[%s5 + $0x8] sm:$0xff] %v270
  %287 = vst [vmem:[%s5 + $0x10] sm:$0xff] %v271
  %288 = vst [vmem:[%s5 + $0x18] sm:$0xff] %v272
  %289 = vst [vmem:[%s5 + $0x20] sm:$0xff] %v273
  %290 = vst [vmem:[%s5 + $0x28] sm:$0xff] %v274
  %291 = vst [vmem:[%s5 + $0x30] sm:$0xff] %v275
  %292 = vst [vmem:[%s5 + $0x38] sm:$0xff] %v276
  %293 = vst [vmem:[%s5 + $0x40] sm:$0xff] %v277
  %294 = vst [vmem:[%s5 + $0x48] sm:$0xff] %v278
  %295 = vst [vmem:[%s5 + $0x50] sm:$0xff] %v279
  %296 = vst [vmem:[%s5 + $0x58] sm:$0xff] %v280
  %297 = vst [vmem:[%s5 + $0x60] sm:$0xff] %v281
  %298 = vst [vmem:[%s5 + $0x68] sm:$0xff] %v282
  %299 = vst [vmem:[%s5 + $0x70] sm:$0xff] %v283
  %300 = vst [vmem:[%s5 + $0x78] sm:$0xff] %v284
  // Predicated region
  $region22: #{conv_block_forward.5} parent=0 // pred_check
    _
  $region23: #{conv_block_forward.5} parent=0 // pred_check_branch
    %302 = sbr.rel (0) target = $region25
  $region24: #{conv_block_forward.5} parent=0 // pred_region
    _
  $region25: #{conv_block_forward.5} parent=0 // pred_fallthru
    _
  // Predicated region
  $region26: #{conv_block_forward.5} parent=0 // pred_check
    _
  $region27: #{conv_block_forward.5} parent=0 // pred_check_branch
    %304 = sbr.rel (0) target = $region29
  $region28: #{conv_block_forward.5} parent=0 // pred_region
    _
  $region29: #{conv_block_forward.5} parent=0 // pred_fallthru
    _

</llo_original>
